<compile_context>
chip_gen: v7x
topology: tpu7x:2x2x1
jax: 0.10.0
libtpu: 0.0.40
codegen_flags: <defaults>
</compile_context>

<pallas_src>
import functools
import math

import jax
import jax.numpy as jnp
from jax.experimental import pallas as pl
from jax.experimental.pallas import tpu as pltpu


def _round_up(x, m):
    return ((x + m - 1) // m) * m


def _pick_time_block(T, cap=16):
    """Largest block <= cap that divides T (so no time padding / no mask path);
    falls back to `cap` with masked padded steps when T has no divisor >= 8."""
    cap = min(T, cap)
    for cand in range(cap, 7, -1):
        if T % cand == 0:
            return cand
    return cap


# ----------------------------------------------------------------------------
# Kernel 1: tiled matmul + bias (per-layer input projection, and the final FC)
# ----------------------------------------------------------------------------
def _matmul_bias_kernel(x_ref, w_ref, b_ref, o_ref):
    x = x_ref[...].astype(w_ref.dtype)   # bf16 for the LSTM projections, f32 for FC
    o_ref[...] = (jnp.dot(x, w_ref[...], preferred_element_type=jnp.float32)
                  + b_ref[...])


def matmul_bias(x, w, b):
    """x: (M, K) f32, w: (K, N), b: (1, N) f32  ->  (M, N) f32.  N must be a
    multiple of 128 (callers pre-pad) so the output stores are lane-dense."""
    M, K = x.shape
    N = w.shape[1]
    tm = min(M, 512)
    return pl.pallas_call(
        _matmul_bias_kernel,
        out_shape=jax.ShapeDtypeStruct((M, N), jnp.float32),
        grid=(pl.cdiv(M, tm),),
        in_specs=[
            pl.BlockSpec((tm, K), lambda i: (i, 0)),
            pl.BlockSpec((K, N), lambda i: (0, 0)),
            pl.BlockSpec((1, N), lambda i: (0, 0)),
        ],
        out_specs=pl.BlockSpec((tm, N), lambda i: (i, 0)),
        compiler_params=pltpu.CompilerParams(
            dimension_semantics=("parallel",)),
    )(x, w, b)


# ----------------------------------------------------------------------------
# Kernel 2: the recurrence.  grid = (num_dirs, num_time_blocks).
#   gx_ref : (TB, Bp, 4Hp)  pre-projected gates (x@W_ih^T + b) for this block/dir
#   whh_ref: (1, Hp, 4Hp)   resident recurrent weights (bf16) for this direction
#   out_ref: (TB, Bp, Hp)   hidden states (this direction's half of the output)
#   h_sc/c_sc persist across the (sequential) time-block axis.
# ----------------------------------------------------------------------------
def _lstm_rec_kernel(gx_ref, whh_ref, out_ref, h_sc, c_sc, *,
                     seq_len, padded_len, hidden_p):
    d = pl.program_id(0)            # direction: 0 = forward, 1 = backward
    i = pl.program_id(1)            # time-block index (in this direction's order)
    nt = pl.num_programs(1)
    tb = gx_ref.shape[0]
    Hp = hidden_p

    @pl.when(i == 0)
    def _():
        h_sc[...] = jnp.zeros_like(h_sc)
        c_sc[...] = jnp.zeros_like(c_sc)

    # Forward walks time blocks 0..nt-1, backward walks nt-1..0.
    t_block = i + d * (nt - 1 - 2 * i)
    w = whh_ref[0]                  # (Hp, 4Hp) bf16, loaded once per block

    def step(s, carry):
        idx = s + d * (tb - 1 - 2 * s)          # within-block time (reversed if d==1)
        h_prev = h_sc[...]
        gates = gx_ref[idx] + jnp.dot(h_prev.astype(w.dtype), w,
                                      preferred_element_type=jnp.float32)
        i_g = jax.nn.sigmoid(gates[:, 0 * Hp:1 * Hp])
        f_g = jax.nn.sigmoid(gates[:, 1 * Hp:2 * Hp])
        g_g = jnp.tanh(gates[:, 2 * Hp:3 * Hp])
        o_g = jax.nn.sigmoid(gates[:, 3 * Hp:4 * Hp])
        c_new = f_g * c_sc[...] + i_g * g_g
        h_new = o_g * jnp.tanh(c_new)
        if padded_len == seq_len:               # static: no time padding present
            c_sc[...] = c_new
            h_sc[...] = h_new
        else:                                   # freeze state on padded time steps
            valid = (t_block * tb + idx) < seq_len
            c_sc[...] = jnp.where(valid, c_new, c_sc[...])
            h_sc[...] = jnp.where(valid, h_new, h_prev)
        out_ref[idx] = h_sc[...].astype(out_ref.dtype)
        return carry

    jax.lax.fori_loop(0, tb, step, 0, unroll=True)


def lstm_recurrence(gx, whh, *, seq_len, time_block, hidden_p, num_dirs):
    """gx: (Tp, Bp, num_dirs*4*Hp) f32;  whh: (num_dirs, Hp, 4*Hp) bf16.
    Returns (Tp, Bp, num_dirs*Hp) f32 (forward half | backward half)."""
    Tp, Bp, _ = gx.shape
    G = 4 * hidden_p
    nt = Tp // time_block
    kernel = functools.partial(_lstm_rec_kernel, seq_len=seq_len,
                               padded_len=Tp, hidden_p=hidden_p)
    tmap = lambda d, i: (i + d * (nt - 1 - 2 * i), 0, d)
    # NOTE: for large Hp, the bf16 cast of W_hh^T keeps the resident weight tile
    # within the v7x 64 MiB VMEM budget; at these test sizes everything is tiny.
    return pl.pallas_call(
        kernel,
        out_shape=jax.ShapeDtypeStruct((Tp, Bp, num_dirs * hidden_p), jnp.float32),
        grid=(num_dirs, nt),
        in_specs=[
            pl.BlockSpec((time_block, Bp, G), tmap),
            pl.BlockSpec((1, hidden_p, G), lambda d, i: (d, 0, 0)),
        ],
        out_specs=pl.BlockSpec((time_block, Bp, hidden_p), tmap),
        scratch_shapes=[
            pltpu.VMEM((Bp, hidden_p), jnp.float32),   # h state
            pltpu.VMEM((Bp, hidden_p), jnp.float32),   # c state
        ],
        compiler_params=pltpu.CompilerParams(
            dimension_semantics=("parallel", "arbitrary")),
    )(gx, whh)


# ----------------------------------------------------------------------------
# Parameters: PyTorch-layout init + one-time prep (pad / transpose / bf16 cast)
# ----------------------------------------------------------------------------
def init_params(key, input_size, hidden_size, num_layers, output_size,
                bidirectional):
    num_dirs = 2 if bidirectional else 1
    k_lstm = 1.0 / math.sqrt(hidden_size)
    layers = []
    for l in range(num_layers):
        in_dim = input_size if l == 0 else hidden_size * num_dirs
        dirs = []
        for _ in range(num_dirs):
            key, k1, k2, k3, k4 = jax.random.split(key, 5)
            dirs.append(dict(
                w_ih=jax.random.uniform(k1, (4 * hidden_size, in_dim),
                                        minval=-k_lstm, maxval=k_lstm),
                w_hh=jax.random.uniform(k2, (4 * hidden_size, hidden_size),
                                        minval=-k_lstm, maxval=k_lstm),
                b_ih=jax.random.uniform(k3, (4 * hidden_size,),
                                        minval=-k_lstm, maxval=k_lstm),
                b_hh=jax.random.uniform(k4, (4 * hidden_size,),
                                        minval=-k_lstm, maxval=k_lstm),
            ))
        layers.append(dirs)
    fc_in = hidden_size * num_dirs
    k_fc = 1.0 / math.sqrt(fc_in)
    key, k1, k2 = jax.random.split(key, 3)
    fc_w = jax.random.uniform(k1, (output_size, fc_in), minval=-k_fc, maxval=k_fc)
    fc_b = jax.random.uniform(k2, (output_size,), minval=-k_fc, maxval=k_fc)
    return dict(lstm=layers, fc_w=fc_w, fc_b=fc_b)


def prepare_params(params, *, hidden_size, bidirectional):
    """One-time kernel-friendly packing: gate-padded (H->Hp mult of 128),
    pre-transposed, per-direction-stacked, bf16 matmul weights.  The FC weight
    is lane-padded (O->Op mult of 128) so the FC kernel's stores are unmasked."""
    H = hidden_size
    Hp = _round_up(H, 128)
    G = 4 * Hp
    num_dirs = 2 if bidirectional else 1

    def pad_gate_rows(a):             # (4H, C) -> (4Hp, C), zero-pad each gate block
        a4 = a.reshape(4, H, -1)
        a4 = jnp.pad(a4, ((0, 0), (0, Hp - H), (0, 0)))
        return a4.reshape(4 * Hp, -1)

    def pad_dir_cols(a):              # (R, num_dirs*H) -> (R, num_dirs*Hp)
        R = a.shape[0]
        a3 = a.reshape(R, num_dirs, H)
        a3 = jnp.pad(a3, ((0, 0), (0, 0), (0, Hp - H)))
        return a3.reshape(R, num_dirs * Hp)

    layers = []
    for l, layer in enumerate(params["lstm"]):
        wih_cols, whh_list, b_list = [], [], []
        for p in layer:
            wih = pad_gate_rows(p["w_ih"])                   # (G, in_dim)
            if l > 0:
                wih = pad_dir_cols(wih)                      # (G, num_dirs*Hp)
            wih_cols.append(jnp.transpose(wih))              # (in_p, G)
            whh = pad_gate_rows(p["w_hh"])                   # (G, H)
            whh = jnp.pad(whh, ((0, 0), (0, Hp - H)))        # (G, Hp)
            whh_list.append(jnp.transpose(whh))              # (Hp, G)
            b_list.append(pad_gate_rows((p["b_ih"] + p["b_hh"])[:, None])[:, 0])
        layers.append(dict(
            wih=jnp.concatenate(wih_cols, axis=1).astype(jnp.bfloat16),  # (in_p, nd*G)
            whh=jnp.stack(whh_list, axis=0).astype(jnp.bfloat16),        # (nd, Hp, G)
            b=jnp.concatenate(b_list).reshape(1, num_dirs * G).astype(jnp.float32),
        ))

    O = params["fc_b"].shape[0]
    Op = _round_up(O, 128)                                     # lane-dense FC output
    fc_w = pad_dir_cols(params["fc_w"])                        # (O, nd*Hp)
    fc_w = jnp.pad(jnp.transpose(fc_w), ((0, 0), (0, Op - O))) # (nd*Hp, Op)
    fc_b = jnp.pad(params["fc_b"], (0, Op - O)).reshape(1, Op)
    return dict(
        layers=layers,
        fc_w=fc_w.astype(jnp.float32),
        fc_b=fc_b.astype(jnp.float32),
        H=H, Hp=Hp, num_dirs=num_dirs, out_size=O,
    )


# ----------------------------------------------------------------------------
# Forward pass (matches the PyTorch module: out[:, -1, :] -> fc)
# ----------------------------------------------------------------------------
def lstm_model_forward(prep, x):
    """x: (B, T, input_size) batch_first, like the PyTorch module."""
    B, T, _ = x.shape
    Hp, num_dirs = prep["Hp"], prep["num_dirs"]
    Bp = _round_up(B, 8)
    TB = _pick_time_block(T)              # time steps per recurrent grid iteration
    Tp = _round_up(T, TB)
    nd_G = num_dirs * 4 * Hp

    # One small layout fixup of the raw input only (input_size-wide tensor).
    seq = jnp.transpose(x, (1, 0, 2)).astype(jnp.float32)     # (T, B, D)
    seq = jnp.pad(seq, ((0, Tp - T), (0, Bp - B), (0, 0)))    # (Tp, Bp, D)

    for layer in prep["layers"]:
        F = seq.shape[-1]
        gx = matmul_bias(seq.reshape(Tp * Bp, F), layer["wih"], layer["b"])
        gx = gx.reshape(Tp, Bp, nd_G)                          # pre-projected gates
        seq = lstm_recurrence(gx, layer["whh"], seq_len=T, time_block=TB,
                              hidden_p=Hp, num_dirs=num_dirs)  # (Tp, Bp, nd*Hp)

    last = seq[T - 1]                     # (Bp, nd*Hp); padded h columns are exactly 0
    out = matmul_bias(last, prep["fc_w"], prep["fc_b"])        # (Bp, Op), f32
    return out[:B, :prep["out_size"]]


# ----------------------------------------------------------------------------
# Pure-JAX f32 reference (operates on the raw PyTorch-layout params)
# ----------------------------------------------------------------------------
def _ref_layer(x_tbd, w_ih, w_hh, b_ih, b_hh, reverse):
    T, B, _ = x_tbd.shape
    H = w_hh.shape[1]

    def step(carry, x_t):
        h, c = carry
        gates = x_t @ w_ih.T + h @ w_hh.T + b_ih + b_hh
        i, f, g, o = jnp.split(gates, 4, axis=-1)
        i, f, o = jax.nn.sigmoid(i), jax.nn.sigmoid(f), jax.nn.sigmoid(o)
        g = jnp.tanh(g)
        c = f * c + i * g
        h = o * jnp.tanh(c)
        return (h, c), h

    xs = x_tbd[::-1] if reverse else x_tbd
    _, hs = jax.lax.scan(step, (jnp.zeros((B, H)), jnp.zeros((B, H))), xs)
    return hs[::-1] if reverse else hs


def ref_forward(params, x):
    seq = jnp.transpose(x, (1, 0, 2)).astype(jnp.float32)
    for layer in params["lstm"]:
        outs = [_ref_layer(seq, p["w_ih"], p["w_hh"], p["b_ih"], p["b_hh"],
                           reverse=(d == 1)) for d, p in enumerate(layer)]
        seq = jnp.concatenate(outs, axis=-1) if len(outs) > 1 else outs[0]
    return seq[-1] @ params["fc_w"].T + params["fc_b"]


# ----------------------------------------------------------------------------
if __name__ == "__main__":
    B, T = 2, 8
    input_size, hidden_size, num_layers, output_size = 16, 32, 2, 8
    bidirectional = True

    key = jax.random.PRNGKey(0)
    k_p, k_x = jax.random.split(key)
    params = init_params(k_p, input_size, hidden_size, num_layers,
                         output_size, bidirectional)
    prep = prepare_params(params, hidden_size=hidden_size,
                          bidirectional=bidirectional)
    x = jax.random.normal(k_x, (B, T, input_size), dtype=jnp.float32)

    out = lstm_model_forward(prep, x)
    out = jax.block_until_ready(out)
    assert out.shape == (B, output_size), out.shape

    ref = jax.block_until_ready(ref_forward(params, x))
    # bf16 matmul operands (f32 accumulation) => loosened tolerance vs f32 reference.
    assert jnp.allclose(out, ref, atol=5e-2, rtol=5e-2), \
        f"max err {jnp.max(jnp.abs(out - ref))}"

    print("KERNEL_OK")
</pallas_src>

<mosaic_0001>
module attributes {stable_mosaic.version = 11 : i64} {
  func.func @_matmul_bias_kernel(%arg0: i32, %arg1: memref<64x16xf32, #tpu.memory_space<vmem>>, %arg2: memref<16x1024xbf16, #tpu.memory_space<vmem>>, %arg3: memref<1x1024xf32, #tpu.memory_space<vmem>>, %arg4: memref<64x1024xf32, #tpu.memory_space<vmem>>) attributes {dimension_semantics = [#tpu.dimension_semantics<parallel>], iteration_bounds = array<i64: 1>, scalar_prefetch = 0 : i64, scratch_operands = 0 : i64, tpu.core_type = #tpu.core_type<tc>, window_params = [{transform_indices = @transform_0, window_bounds = array<i64: 64, 16>}, {pipeline_mode = #tpu.pipeline_mode<synchronous>, transform_indices = @transform_1, window_bounds = array<i64: 16, 1024>}, {pipeline_mode = #tpu.pipeline_mode<synchronous>, transform_indices = @transform_2, window_bounds = array<i64: 1, 1024>}, {transform_indices = @transform_3, window_bounds = array<i64: 64, 1024>}]} {
    %c0 = arith.constant 0 : index
    %c0_0 = arith.constant 0 : index
    %0 = vector.load %arg1[%c0, %c0_0] : memref<64x16xf32, #tpu.memory_space<vmem>>, vector<64x16xf32>
    %1 = arith.truncf %0 : vector<64x16xf32> to vector<64x16xbf16>
    %c0_1 = arith.constant 0 : index
    %c0_2 = arith.constant 0 : index
    %2 = vector.load %arg2[%c0_1, %c0_2] : memref<16x1024xbf16, #tpu.memory_space<vmem>>, vector<16x1024xbf16>
    %cst = arith.constant dense<0.000000e+00> : vector<64x1024xf32>
    %3 = tpu.matmul %1, %2, %cst {dimension_numbers = #tpu.dot_dimension_numbers<[1], [0], [0], [1], [0, 0, 1, 1], [], []>} : vector<64x16xbf16>, vector<16x1024xbf16>, vector<64x1024xf32> -> vector<64x1024xf32>
    %c0_3 = arith.constant 0 : index
    %c0_4 = arith.constant 0 : index
    %4 = vector.load %arg3[%c0_3, %c0_4] : memref<1x1024xf32, #tpu.memory_space<vmem>>, vector<1x1024xf32>
    %5 = vector.broadcast %4 : vector<1x1024xf32> to vector<64x1024xf32>
    %6 = arith.addf %3, %5 : vector<64x1024xf32>
    %c0_5 = arith.constant 0 : index
    %c0_6 = arith.constant 0 : index
    %7 = vector.load %arg4[%c0_5, %c0_6] : memref<64x1024xf32, #tpu.memory_space<vmem>>, vector<64x1024xf32>
    tpu.vector_store %arg4[%c0_5, %c0_6], %6 {strides = array<i32>} : memref<64x1024xf32, #tpu.memory_space<vmem>>, vector<64x1024xf32>,
    return
  }
  func.func @transform_0(%arg0: i32) -> (i32, i32) {
    %c0_i32 = arith.constant 0 : i32
    %c0_i32_0 = arith.constant 0 : i32
    return %arg0, %c0_i32 : i32, i32
  }
  func.func @transform_1(%arg0: i32) -> (i32, i32) {
    %c0_i32 = arith.constant 0 : i32
    %c0_i32_0 = arith.constant 0 : i32
    %c0_i32_1 = arith.constant 0 : i32
    return %c0_i32, %c0_i32_0 : i32, i32
  }
  func.func @transform_2(%arg0: i32) -> (i32, i32) {
    %c0_i32 = arith.constant 0 : i32
    %c0_i32_0 = arith.constant 0 : i32
    %c0_i32_1 = arith.constant 0 : i32
    return %c0_i32, %c0_i32_0 : i32, i32
  }
  func.func @transform_3(%arg0: i32) -> (i32, i32) {
    %c0_i32 = arith.constant 0 : i32
    %c0_i32_0 = arith.constant 0 : i32
    return %arg0, %c0_i32 : i32, i32
  }
}

</mosaic_0001>

<llo_original>
// kernel: tpu_custom_call.1
$region0: #{tpu_custom_call.1}
  #allocation0 [shape = 'u32[]', space=smem, size = 0x4, offset = 0x4, fixed_abs, tag = 'smem constant byte address 0x4 - core index']
  #allocation1 [shape = 'u32[144,128]{1,0:T(1,128)}', space=vmem, size = 0x12000, scoped, tag = 'internal scratch']
  %s0 = inlined_call_operand.vmem [shape: f32[64,16], index: 0, kind: input, shape index: {}]
  %s1 = inlined_call_operand.vmem [shape: bf16[16,1024], index: 1, kind: input, shape index: {}]
  %s2 = inlined_call_operand.vmem [shape: f32[1,1024], index: 2, kind: input, shape index: {}]
  %s3 = inlined_call_operand.hbm [shape: f32[64,1024], index: 3, kind: output, shape index: {}]
  %s4 = sld [smem:[#allocation0]]
  $region22: #{tpu_custom_call.1} parent=0
    _
  %s6 = ssub.s32 1, %s4
  %s7 = scalar_select 0, %s6, %s4
  $region1: #{tpu_custom_call.1} parent=0
    #allocation2 [shape = 'u8[262144]{0}', space=vmem, size = 0x40000, scoped, tag = 'output window, operand 0, single buffered']
    #allocation3 [shape = 's32[1]{0}', space=sflag, size = 0x4, scoped, tag = 'scoped memory for tpu_custom_call.1']
    %8 = vsyncpa [#allocation3], 0
    // Predicated region
    $region2: #{tpu_custom_call.1} parent=1 // pred_check
      _
    $region3: #{tpu_custom_call.1} parent=1 // pred_check_branch
      %10 = sbr.rel (0) target = $region5
    $region4: #{tpu_custom_call.1} parent=1 // pred_region
      _
    $region5: #{tpu_custom_call.1} parent=1 // pred_fallthru
      _
    // Predicated region
    $region6: #{tpu_custom_call.1} parent=1 // pred_check
      _
    $region7: #{tpu_custom_call.1} parent=1 // pred_check_branch
      %12 = sbr.rel (0) target = $region9
    $region8: #{tpu_custom_call.1} parent=1 // pred_region
      _
    $region9: #{tpu_custom_call.1} parent=1 // pred_fallthru
      _
    // Predicated region
    $region10: #{tpu_custom_call.1} parent=1 // pred_check
      _
    $region11: #{tpu_custom_call.1} parent=1 // pred_check_branch
      %14 = sbr.rel (0) target = $region13
    $region12: #{tpu_custom_call.1} parent=1 // pred_region
      _
    $region13: #{tpu_custom_call.1} parent=1 // pred_fallthru
      _
    %v16 = vld [vmem:[%s0] sm:$0xff]
    %v17 = vld [vmem:[%s0 + $0x8] sm:$0xff]
    %v18 = vld [vmem:[%s0 + $0x10] sm:$0xff]
    %v19 = vld [vmem:[%s0 + $0x18] sm:$0xff]
    %v20 = vld [vmem:[%s0 + $0x20] sm:$0xff]
    %v21 = vld [vmem:[%s0 + $0x28] sm:$0xff]
    %v22 = vld [vmem:[%s0 + $0x30] sm:$0xff]
    %v23 = vld [vmem:[%s0 + $0x38] sm:$0xff]
    %v24 = vpack.c.bf16 %v17, %v16
    %v25 = vpack.c.bf16 %v19, %v18
    %v26 = vpack.c.bf16 %v21, %v20
    %v27 = vpack.c.bf16 %v23, %v22
    %v28 = vld [vmem:[%s1] sm:$0xff]
    %v29 = vld [vmem:[%s1 + $0x8] sm:$0xff]
    %v30 = vld [vmem:[%s1 + $0x10] sm:$0xff]
    %v31 = vld [vmem:[%s1 + $0x18] sm:$0xff]
    %v32 = vld [vmem:[%s1 + $0x20] sm:$0xff]
    %v33 = vld [vmem:[%s1 + $0x28] sm:$0xff]
    %v34 = vld [vmem:[%s1 + $0x30] sm:$0xff]
    %v35 = vld [vmem:[%s1 + $0x38] sm:$0xff]
    %v36 = vld [vmem:[%s2] sm:$0xff]
    %v38 = vlaneseq
    %v39 = vshrl.u32 %v38, 7
    %v40 = vsub.s32 0, %v39
    %v41 = vrot.slane %v36, %v40
    %v42 = vlaneseq
    %v43 = vshrl.u32 %v42, 7
    %v44 = vsub.s32 1, %v43
    %v45 = vrot.slane %v36, %v44
    %v46 = vlaneseq
    %v47 = vshrl.u32 %v46, 7
    %v48 = vsub.s32 2, %v47
    %v49 = vrot.slane %v36, %v48
    %v50 = vlaneseq
    %v51 = vshrl.u32 %v50, 7
    %v52 = vsub.s32 3, %v51
    %v53 = vrot.slane %v36, %v52
    %v54 = vlaneseq
    %v55 = vshrl.u32 %v54, 7
    %v56 = vsub.s32 4, %v55
    %v57 = vrot.slane %v36, %v56
    %v58 = vlaneseq
    %v59 = vshrl.u32 %v58, 7
    %v60 = vsub.s32 5, %v59
    %v61 = vrot.slane %v36, %v60
    %v62 = vlaneseq
    %v63 = vshrl.u32 %v62, 7
    %v64 = vsub.s32 6, %v63
    %v65 = vrot.slane %v36, %v64
    %v66 = vlaneseq
    %v67 = vshrl.u32 %v66, 7
    %v68 = vsub.s32 7, %v67
    %v69 = vrot.slane %v36, %v68
    %v86 = vunpack.c.l.b16 %v28
    %v87 = vunpack.c.h.b16 %v28
    %v88 = vunpack.c.l.b16 %v29
    %v89 = vunpack.c.h.b16 %v29
    %v90 = vunpack.c.l.b16 %v30
    %v91 = vunpack.c.h.b16 %v30
    %v92 = vunpack.c.l.b16 %v31
    %v93 = vunpack.c.h.b16 %v31
    %v94 = vunpack.c.l.b16 %v32
    %v95 = vunpack.c.h.b16 %v32
    %v96 = vunpack.c.l.b16 %v33
    %v97 = vunpack.c.h.b16 %v33
    %v98 = vunpack.c.l.b16 %v34
    %v99 = vunpack.c.h.b16 %v34
    %v100 = vunpack.c.l.b16 %v35
    %v101 = vunpack.c.h.b16 %v35
    %v102 = vpack.c.b16 %v94, %v86
    %v103 = vpack.c.b16 %v95, %v87
    %v104 = vpack.c.b16 %v96, %v88
    %v105 = vpack.c.b16 %v97, %v89
    %v106 = vpack.c.b16 %v98, %v90
    %v107 = vpack.c.b16 %v99, %v91
    %v108 = vpack.c.b16 %v100, %v92
    %v109 = vpack.c.b16 %v101, %v93
    %vm118 = vcmask 130048
    %v120 = vsel %vm118, %v24, 0
    %v123 = vsel %vm118, %v25, 0
    %v126 = vsel %vm118, %v26, 0
    %v129 = vsel %vm118, %v27, 0
    %131 = vmatprep.subr.bf16.mxu0 %v103
    %132 = vmatpush1.bf16.msra.mxu0 %v102
    %133 = vmatprep.subr.bf16.mxu0 0
    %134 = vmatpush1.bf16.msra.mxu0 0
    %135 = vmatprep.subr.bf16.mxu0 0
    %136 = vmatpush1.bf16.msra.mxu0 0
    %137 = vmatprep.subr.bf16.mxu0 0
    %138 = vmatpush1.bf16.msra.mxu0 0
    %139 = vmatprep.subr.bf16.mxu0 0
    %140 = vmatpush1.bf16.msra.mxu0 0
    %141 = vmatprep.subr.bf16.mxu0 0
    %142 = vmatpush1.bf16.msra.mxu0 0
    %143 = vmatprep.subr.bf16.mxu0 0
    %144 = vmatpush1.bf16.msra.mxu0 0
    %145 = vmatprep.subr.bf16.mxu0 0
    %146 = vmatpush1.bf16.msra.mxu0 0
    %147 = vmatprep.subr.bf16.mxu0 0
    %148 = vmatpush1.bf16.msra.mxu0 0
    %149 = vmatprep.subr.bf16.mxu0 0
    %150 = vmatpush1.bf16.msra.mxu0 0
    %151 = vmatprep.subr.bf16.mxu0 0
    %152 = vmatpush1.bf16.msra.mxu0 0
    %153 = vmatprep.subr.bf16.mxu0 0
    %154 = vmatpush1.bf16.msra.mxu0 0
    %155 = vmatprep.subr.bf16.mxu0 0
    %156 = vmatpush1.bf16.msra.mxu0 0
    %157 = vmatprep.subr.bf16.mxu0 0
    %158 = vmatpush1.bf16.msra.mxu0 0
    %159 = vmatprep.subr.bf16.mxu0 0
    %160 = vmatpush1.bf16.msra.mxu0 0
    %161 = vmatprep.subr.bf16.mxu0 0
    %162 = vmatpush1.bf16.msra.mxu0 0
    %163 = vmatprep.mubr.bf16.mxu0 0
    %164 = vmatmul.mubr.bf16.gmra.mrb[0].mxu0 %v120
    %v165 = vpop.f32.mrb[0].mxu0
    %v166 = vadd.f32 %v41, %v165
    %v167 = vpop.f32.mrb[0].mxu0
    %v168 = vadd.f32 %v45, %v167
    %v169 = vpop.f32.mrb[0].mxu0
    %v170 = vadd.f32 %v41, %v169
    %v171 = vpop.f32.mrb[0].mxu0
    %v172 = vadd.f32 %v45, %v171
    %173 = vmatprep.mubr.bf16.mxu0 0
    %174 = vmatmul.mubr.bf16.gmra.mrb[0].mxu0 %v123
    %v175 = vpop.f32.mrb[0].mxu0
    %v176 = vadd.f32 %v41, %v175
    %v177 = vpop.f32.mrb[0].mxu0
    %v178 = vadd.f32 %v45, %v177
    %v179 = vpop.f32.mrb[0].mxu0
    %v180 = vadd.f32 %v41, %v179
    %v181 = vpop.f32.mrb[0].mxu0
    %v182 = vadd.f32 %v45, %v181
    %183 = vmatprep.mubr.bf16.mxu0 0
    %184 = vmatmul.mubr.bf16.gmra.mrb[0].mxu0 %v126
    %v185 = vpop.f32.mrb[0].mxu0
    %v186 = vadd.f32 %v41, %v185
    %v187 = vpop.f32.mrb[0].mxu0
    %v188 = vadd.f32 %v45, %v187
    %v189 = vpop.f32.mrb[0].mxu0
    %v190 = vadd.f32 %v41, %v189
    %v191 = vpop.f32.mrb[0].mxu0
    %v192 = vadd.f32 %v45, %v191
    %193 = vmatprep.mubr.bf16.mxu0 0
    %194 = vmatmul.mubr.bf16.gmra.mrb[0].mxu0 %v129
    %v195 = vpop.f32.mrb[0].mxu0
    %v196 = vadd.f32 %v41, %v195
    %v197 = vpop.f32.mrb[0].mxu0
    %v198 = vadd.f32 %v45, %v197
    %v199 = vpop.f32.mrb[0].mxu0
    %v200 = vadd.f32 %v41, %v199
    %v201 = vpop.f32.mrb[0].mxu0
    %v202 = vadd.f32 %v45, %v201
    %203 = vdwg.mxu0
    %204 = vmatprep.subr.bf16.mxu0 %v105
    %205 = vmatpush1.bf16.msra.mxu0 %v104
    %206 = vmatprep.subr.bf16.mxu0 0
    %207 = vmatpush1.bf16.msra.mxu0 0
    %208 = vmatprep.subr.bf16.mxu0 0
    %209 = vmatpush1.bf16.msra.mxu0 0
    %210 = vmatprep.subr.bf16.mxu0 0
    %211 = vmatpush1.bf16.msra.mxu0 0
    %212 = vmatprep.subr.bf16.mxu0 0
    %213 = vmatpush1.bf16.msra.mxu0 0
    %214 = vmatprep.subr.bf16.mxu0 0
    %215 = vmatpush1.bf16.msra.mxu0 0
    %216 = vmatprep.subr.bf16.mxu0 0
    %217 = vmatpush1.bf16.msra.mxu0 0
    %218 = vmatprep.subr.bf16.mxu0 0
    %219 = vmatpush1.bf16.msra.mxu0 0
    %220 = vmatprep.subr.bf16.mxu0 0
    %221 = vmatpush1.bf16.msra.mxu0 0
    %222 = vmatprep.subr.bf16.mxu0 0
    %223 = vmatpush1.bf16.msra.mxu0 0
    %224 = vmatprep.subr.bf16.mxu0 0
    %225 = vmatpush1.bf16.msra.mxu0 0
    %226 = vmatprep.subr.bf16.mxu0 0
    %227 = vmatpush1.bf16.msra.mxu0 0
    %228 = vmatprep.subr.bf16.mxu0 0
    %229 = vmatpush1.bf16.msra.mxu0 0
    %230 = vmatprep.subr.bf16.mxu0 0
    %231 = vmatpush1.bf16.msra.mxu0 0
    %232 = vmatprep.subr.bf16.mxu0 0
    %233 = vmatpush1.bf16.msra.mxu0 0
    %234 = vmatprep.subr.bf16.mxu0 0
    %235 = vmatpush1.bf16.msra.mxu0 0
    %236 = vmatprep.mubr.bf16.mxu0 0
    %237 = vmatmul.mubr.bf16.gmra.mrb[0].mxu0 %v120
    %v238 = vpop.f32.mrb[0].mxu0
    %v239 = vadd.f32 %v49, %v238
    %v240 = vpop.f32.mrb[0].mxu0
    %v241 = vadd.f32 %v53, %v240
    %v242 = vpop.f32.mrb[0].mxu0
    %v243 = vadd.f32 %v49, %v242
    %v244 = vpop.f32.mrb[0].mxu0
    %v245 = vadd.f32 %v53, %v244
    %246 = vmatprep.mubr.bf16.mxu0 0
    %247 = vmatmul.mubr.bf16.gmra.mrb[0].mxu0 %v123
    %v248 = vpop.f32.mrb[0].mxu0
    %v249 = vadd.f32 %v49, %v248
    %v250 = vpop.f32.mrb[0].mxu0
    %v251 = vadd.f32 %v53, %v250
    %v252 = vpop.f32.mrb[0].mxu0
    %v253 = vadd.f32 %v49, %v252
    %v254 = vpop.f32.mrb[0].mxu0
    %v255 = vadd.f32 %v53, %v254
    %256 = vmatprep.mubr.bf16.mxu0 0
    %257 = vmatmul.mubr.bf16.gmra.mrb[0].mxu0 %v126
    %v258 = vpop.f32.mrb[0].mxu0
    %v259 = vadd.f32 %v49, %v258
    %v260 = vpop.f32.mrb[0].mxu0
    %v261 = vadd.f32 %v53, %v260
    %v262 = vpop.f32.mrb[0].mxu0
    %v263 = vadd.f32 %v49, %v262
    %v264 = vpop.f32.mrb[0].mxu0
    %v265 = vadd.f32 %v53, %v264
    %266 = vmatprep.mubr.bf16.mxu0 0
    %267 = vmatmul.mubr.bf16.gmra.mrb[0].mxu0 %v129
    %v268 = vpop.f32.mrb[0].mxu0
    %v269 = vadd.f32 %v49, %v268
    %v270 = vpop.f32.mrb[0].mxu0
    %v271 = vadd.f32 %v53, %v270
    %v272 = vpop.f32.mrb[0].mxu0
    %v273 = vadd.f32 %v49, %v272
    %v274 = vpop.f32.mrb[0].mxu0
    %v275 = vadd.f32 %v53, %v274
    %276 = vdwg.mxu0
    %277 = vmatprep.subr.bf16.mxu0 %v107
    %278 = vmatpush1.bf16.msra.mxu0 %v106
    %279 = vmatprep.subr.bf16.mxu0 0
    %280 = vmatpush1.bf16.msra.mxu0 0
    %281 = vmatprep.subr.bf16.mxu0 0
    %282 = vmatpush1.bf16.msra.mxu0 0
    %283 = vmatprep.subr.bf16.mxu0 0
    %284 = vmatpush1.bf16.msra.mxu0 0
    %285 = vmatprep.subr.bf16.mxu0 0
    %286 = vmatpush1.bf16.msra.mxu0 0
    %287 = vmatprep.subr.bf16.mxu0 0
    %288 = vmatpush1.bf16.msra.mxu0 0
    %289 = vmatprep.subr.bf16.mxu0 0
    %290 = vmatpush1.bf16.msra.mxu0 0
    %291 = vmatprep.subr.bf16.mxu0 0
    %292 = vmatpush1.bf16.msra.mxu0 0
    %293 = vmatprep.subr.bf16.mxu0 0
    %294 = vmatpush1.bf16.msra.mxu0 0
    %295 = vmatprep.subr.bf16.mxu0 0
    %296 = vmatpush1.bf16.msra.mxu0 0
    %297 = vmatprep.subr.bf16.mxu0 0
    %298 = vmatpush1.bf16.msra.mxu0 0
    %299 = vmatprep.subr.bf16.mxu0 0
    %300 = vmatpush1.bf16.msra.mxu0 0
    %301 = vmatprep.subr.bf16.mxu0 0
    %302 = vmatpush1.bf16.msra.mxu0 0
    %303 = vmatprep.subr.bf16.mxu0 0
    %304 = vmatpush1.bf16.msra.mxu0 0
    %305 = vmatprep.subr.bf16.mxu0 0
    %306 = vmatpush1.bf16.msra.mxu0 0
    %307 = vmatprep.subr.bf16.mxu0 0
    %308 = vmatpush1.bf16.msra.mxu0 0
    %309 = vmatprep.mubr.bf16.mxu0 0
    %310 = vmatmul.mubr.bf16.gmra.mrb[0].mxu0 %v120
    %v311 = vpop.f32.mrb[0].mxu0
    %v312 = vadd.f32 %v57, %v311
    %v313 = vpop.f32.mrb[0].mxu0
    %v314 = vadd.f32 %v61, %v313
    %v315 = vpop.f32.mrb[0].mxu0
    %v316 = vadd.f32 %v57, %v315
    %v317 = vpop.f32.mrb[0].mxu0
    %v318 = vadd.f32 %v61, %v317
    %319 = vmatprep.mubr.bf16.mxu0 0
    %320 = vmatmul.mubr.bf16.gmra.mrb[0].mxu0 %v123
    %v321 = vpop.f32.mrb[0].mxu0
    %v322 = vadd.f32 %v57, %v321
    %v323 = vpop.f32.mrb[0].mxu0
    %v324 = vadd.f32 %v61, %v323
    %v325 = vpop.f32.mrb[0].mxu0
    %v326 = vadd.f32 %v57, %v325
    %v327 = vpop.f32.mrb[0].mxu0
    %v328 = vadd.f32 %v61, %v327
    %329 = vmatprep.mubr.bf16.mxu0 0
    %330 = vmatmul.mubr.bf16.gmra.mrb[0].mxu0 %v126
    %v331 = vpop.f32.mrb[0].mxu0
    %v332 = vadd.f32 %v57, %v331
    %v333 = vpop.f32.mrb[0].mxu0
    %v334 = vadd.f32 %v61, %v333
    %v335 = vpop.f32.mrb[0].mxu0
    %v336 = vadd.f32 %v57, %v335
    %v337 = vpop.f32.mrb[0].mxu0
    %v338 = vadd.f32 %v61, %v337
    %339 = vmatprep.mubr.bf16.mxu0 0
    %340 = vmatmul.mubr.bf16.gmra.mrb[0].mxu0 %v129
    %v341 = vpop.f32.mrb[0].mxu0
    %v342 = vadd.f32 %v57, %v341
    %v343 = vpop.f32.mrb[0].mxu0
    %v344 = vadd.f32 %v61, %v343
    %v345 = vpop.f32.mrb[0].mxu0
    %v346 = vadd.f32 %v57, %v345
    %v347 = vpop.f32.mrb[0].mxu0
    %v348 = vadd.f32 %v61, %v347
    %349 = vdwg.mxu0
    %350 = vmatprep.subr.bf16.mxu0 %v109
    %351 = vmatpush1.bf16.msra.mxu0 %v108
    %352 = vmatprep.subr.bf16.mxu0 0
    %353 = vmatpush1.bf16.msra.mxu0 0
    %354 = vmatprep.subr.bf16.mxu0 0
    %355 = vmatpush1.bf16.msra.mxu0 0
    %356 = vmatprep.subr.bf16.mxu0 0
    %357 = vmatpush1.bf16.msra.mxu0 0
    %358 = vmatprep.subr.bf16.mxu0 0
    %359 = vmatpush1.bf16.msra.mxu0 0
    %360 = vmatprep.subr.bf16.mxu0 0
    %361 = vmatpush1.bf16.msra.mxu0 0
    %362 = vmatprep.subr.bf16.mxu0 0
    %363 = vmatpush1.bf16.msra.mxu0 0
    %364 = vmatprep.subr.bf16.mxu0 0
    %365 = vmatpush1.bf16.msra.mxu0 0
    %366 = vmatprep.subr.bf16.mxu0 0
    %367 = vmatpush1.bf16.msra.mxu0 0
    %368 = vmatprep.subr.bf16.mxu0 0
    %369 = vmatpush1.bf16.msra.mxu0 0
    %370 = vmatprep.subr.bf16.mxu0 0
    %371 = vmatpush1.bf16.msra.mxu0 0
    %372 = vmatprep.subr.bf16.mxu0 0
    %373 = vmatpush1.bf16.msra.mxu0 0
    %374 = vmatprep.subr.bf16.mxu0 0
    %375 = vmatpush1.bf16.msra.mxu0 0
    %376 = vmatprep.subr.bf16.mxu0 0
    %377 = vmatpush1.bf16.msra.mxu0 0
    %378 = vmatprep.subr.bf16.mxu0 0
    %379 = vmatpush1.bf16.msra.mxu0 0
    %380 = vmatprep.subr.bf16.mxu0 0
    %381 = vmatpush1.bf16.msra.mxu0 0
    %382 = vmatprep.mubr.bf16.mxu0 0
    %383 = vmatmul.mubr.bf16.gmra.mrb[0].mxu0 %v120
    %v384 = vpop.f32.mrb[0].mxu0
    %v385 = vadd.f32 %v65, %v384
    %v386 = vpop.f32.mrb[0].mxu0
    %v387 = vadd.f32 %v69, %v386
    %v388 = vpop.f32.mrb[0].mxu0
    %v389 = vadd.f32 %v65, %v388
    %v390 = vpop.f32.mrb[0].mxu0
    %v391 = vadd.f32 %v69, %v390
    %392 = vmatprep.mubr.bf16.mxu0 0
    %393 = vmatmul.mubr.bf16.gmra.mrb[0].mxu0 %v123
    %v394 = vpop.f32.mrb[0].mxu0
    %v395 = vadd.f32 %v65, %v394
    %v396 = vpop.f32.mrb[0].mxu0
    %v397 = vadd.f32 %v69, %v396
    %v398 = vpop.f32.mrb[0].mxu0
    %v399 = vadd.f32 %v65, %v398
    %v400 = vpop.f32.mrb[0].mxu0
    %v401 = vadd.f32 %v69, %v400
    %402 = vmatprep.mubr.bf16.mxu0 0
    %403 = vmatmul.mubr.bf16.gmra.mrb[0].mxu0 %v126
    %v404 = vpop.f32.mrb[0].mxu0
    %v405 = vadd.f32 %v65, %v404
    %v406 = vpop.f32.mrb[0].mxu0
    %v407 = vadd.f32 %v69, %v406
    %v408 = vpop.f32.mrb[0].mxu0
    %v409 = vadd.f32 %v65, %v408
    %v410 = vpop.f32.mrb[0].mxu0
    %v411 = vadd.f32 %v69, %v410
    %412 = vmatprep.mubr.bf16.mxu0 0
    %413 = vmatmul.mubr.bf16.gmra.mrb[0].mxu0 %v129
    %v414 = vpop.f32.mrb[0].mxu0
    %v415 = vadd.f32 %v65, %v414
    %v416 = vpop.f32.mrb[0].mxu0
    %v417 = vadd.f32 %v69, %v416
    %v418 = vpop.f32.mrb[0].mxu0
    %v419 = vadd.f32 %v65, %v418
    %v420 = vpop.f32.mrb[0].mxu0
    %v421 = vadd.f32 %v69, %v420
    %422 = vdwg.mxu0
    %423 = vst [vmem:[#allocation2] sm:$0xff] %v166
    %424 = vst [vmem:[#allocation2 + $0x8] sm:$0xff] %v168
    %425 = vst [vmem:[#allocation2 + $0x10] sm:$0xff] %v239
    %426 = vst [vmem:[#allocation2 + $0x18] sm:$0xff] %v241
    %427 = vst [vmem:[#allocation2 + $0x20] sm:$0xff] %v312
    %428 = vst [vmem:[#allocation2 + $0x28] sm:$0xff] %v314
    %429 = vst [vmem:[#allocation2 + $0x30] sm:$0xff] %v385
    %430 = vst [vmem:[#allocation2 + $0x38] sm:$0xff] %v387
    %431 = vst [vmem:[#allocation2 + $0x40] sm:$0xff] %v170
    %432 = vst [vmem:[#allocation2 + $0x48] sm:$0xff] %v172
    %433 = vst [vmem:[#allocation2 + $0x50] sm:$0xff] %v243
    %434 = vst [vmem:[#allocation2 + $0x58] sm:$0xff] %v245
    %435 = vst [vmem:[#allocation2 + $0x60] sm:$0xff] %v316
    %436 = vst [vmem:[#allocation2 + $0x68] sm:$0xff] %v318
    %437 = vst [vmem:[#allocation2 + $0x70] sm:$0xff] %v389
    %438 = vst [vmem:[#allocation2 + $0x78] sm:$0xff] %v391
    %439 = vst [vmem:[#allocation2 + $0x80] sm:$0xff] %v176
    %440 = vst [vmem:[#allocation2 + $0x88] sm:$0xff] %v178
    %441 = vst [vmem:[#allocation2 + $0x90] sm:$0xff] %v249
    %442 = vst [vmem:[#allocation2 + $0x98] sm:$0xff] %v251
    %443 = vst [vmem:[#allocation2 + $0xa0] sm:$0xff] %v322
    %444 = vst [vmem:[#allocation2 + $0xa8] sm:$0xff] %v324
    %445 = vst [vmem:[#allocation2 + $0xb0] sm:$0xff] %v395
    %446 = vst [vmem:[#allocation2 + $0xb8] sm:$0xff] %v397
    %447 = vst [vmem:[#allocation2 + $0xc0] sm:$0xff] %v180
    %448 = vst [vmem:[#allocation2 + $0xc8] sm:$0xff] %v182
    %449 = vst [vmem:[#allocation2 + $0xd0] sm:$0xff] %v253
    %450 = vst [vmem:[#allocation2 + $0xd8] sm:$0xff] %v255
    %451 = vst [vmem:[#allocation2 + $0xe0] sm:$0xff] %v326
    %452 = vst [vmem:[#allocation2 + $0xe8] sm:$0xff] %v328
    %453 = vst [vmem:[#allocation2 + $0xf0] sm:$0xff] %v399
    %454 = vst [vmem:[#allocation2 + $0xf8] sm:$0xff] %v401
    %455 = vst [vmem:[#allocation2 + $0x100] sm:$0xff] %v186
    %456 = vst [vmem:[#allocation2 + $0x108] sm:$0xff] %v188
    %457 = vst [vmem:[#allocation2 + $0x110] sm:$0xff] %v259
    %458 = vst [vmem:[#allocation2 + $0x118] sm:$0xff] %v261
    %459 = vst [vmem:[#allocation2 + $0x120] sm:$0xff] %v332
    %460 = vst [vmem:[#allocation2 + $0x128] sm:$0xff] %v334
    %461 = vst [vmem:[#allocation2 + $0x130] sm:$0xff] %v405
    %462 = vst [vmem:[#allocation2 + $0x138] sm:$0xff] %v407
    %463 = vst [vmem:[#allocation2 + $0x140] sm:$0xff] %v190
    %464 = vst [vmem:[#allocation2 + $0x148] sm:$0xff] %v192
    %465 = vst [vmem:[#allocation2 + $0x150] sm:$0xff] %v263
    %466 = vst [vmem:[#allocation2 + $0x158] sm:$0xff] %v265
    %467 = vst [vmem:[#allocation2 + $0x160] sm:$0xff] %v336
    %468 = vst [vmem:[#allocation2 + $0x168] sm:$0xff] %v338
    %469 = vst [vmem:[#allocation2 + $0x170] sm:$0xff] %v409
    %470 = vst [vmem:[#allocation2 + $0x178] sm:$0xff] %v411
    %471 = vst [vmem:[#allocation2 + $0x180] sm:$0xff] %v196
    %472 = vst [vmem:[#allocation2 + $0x188] sm:$0xff] %v198
    %473 = vst [vmem:[#allocation2 + $0x190] sm:$0xff] %v269
    %474 = vst [vmem:[#allocation2 + $0x198] sm:$0xff] %v271
    %475 = vst [vmem:[#allocation2 + $0x1a0] sm:$0xff] %v342
    %476 = vst [vmem:[#allocation2 + $0x1a8] sm:$0xff] %v344
    %477 = vst [vmem:[#allocation2 + $0x1b0] sm:$0xff] %v415
    %478 = vst [vmem:[#allocation2 + $0x1b8] sm:$0xff] %v417
    %479 = vst [vmem:[#allocation2 + $0x1c0] sm:$0xff] %v200
    %480 = vst [vmem:[#allocation2 + $0x1c8] sm:$0xff] %v202
    %481 = vst [vmem:[#allocation2 + $0x1d0] sm:$0xff] %v273
    %482 = vst [vmem:[#allocation2 + $0x1d8] sm:$0xff] %v275
    %483 = vst [vmem:[#allocation2 + $0x1e0] sm:$0xff] %v346
    %484 = vst [vmem:[#allocation2 + $0x1e8] sm:$0xff] %v348
    %485 = vst [vmem:[#allocation2 + $0x1f0] sm:$0xff] %v419
    %486 = vst [vmem:[#allocation2 + $0x1f8] sm:$0xff] %v421
    // Predicated region
    $region14: #{tpu_custom_call.1} parent=1 // pred_check
      _
    $region15: #{tpu_custom_call.1} parent=1 // pred_check_branch
      %488 = sbr.rel (0) target = $region17
    $region16: #{tpu_custom_call.1} parent=1 // pred_region
      %s490 = ssub.s32 8192, 8192
      %491 = vsyncadd [#allocation3], %s490
      %s492 = sshll.u32 [#allocation2], 4
      %s493 = int_to_ptr.vmem [resolvable:$true] %s492
      %498 = dma.vmem_to_hbm [thread:$0]  %s493, 8192, %s3, [#allocation3], 1024, 1024, 64
    $region17: #{tpu_custom_call.1} parent=1 // pred_fallthru
      _
    // Predicated region
    $region18: #{tpu_custom_call.1} parent=1 // pred_check
      _
    $region19: #{tpu_custom_call.1} parent=1 // pred_check_branch
      %500 = sbr.rel (0) target = $region21
    $region20: #{tpu_custom_call.1} parent=1 // pred_region
      %501 = dma.done [#allocation3], 8192
    $region21: #{tpu_custom_call.1} parent=1 // pred_fallthru
      _
    %502 = vsyncpa [#allocation3], 1

</llo_original>
